<compile_context>
chip_gen: v6e
topology: v6e:2x2x1
jax: 0.10.0
libtpu: 0.0.40
codegen_flags: <defaults>
</compile_context>

<pallas_src>
import jax
import jax.numpy as jnp
from jax.experimental import pallas as pl
from jax.experimental.pallas import tpu as pltpu


def _round_up(x, m):
    return (x + m - 1) // m * m


def _vmem_capacity_bytes():
    try:
        info = pltpu.get_tpu_info()
        cap = getattr(info, "vmem_capacity_bytes", None)
        if cap:
            return int(cap)
    except Exception:
        pass
    return 64 << 20  # conservative (v7x) fallback


# ---------------------------------------------------------------------------
# Fused kernel:  y = act(norm(x @ W + b))
# ---------------------------------------------------------------------------
def _make_linear_block_kernel(*, norm, activation, has_bias, eps,
                              n_valid, n_padded, single_k):
    def epilogue(y, b_ref, g_ref, bt_ref):
        if has_bias:
            y = y + b_ref[...]
        if norm == "ln":
            # LayerNorm per sample over all (valid) features; padded lanes are zero
            # (zero-padded weight columns / bias) so the plain sum gives the mean.
            mean = jnp.sum(y, axis=1, keepdims=True) * (1.0 / n_valid)
            centered = y - mean
            if n_padded > n_valid:
                lane = jax.lax.broadcasted_iota(jnp.int32, y.shape, 1)
                sq = jnp.where(lane < n_valid, centered * centered, 0.0)
            else:
                sq = centered * centered
            # torch.Tensor.var(1) default is unbiased -> divide by (n - 1).
            var = jnp.sum(sq, axis=1, keepdims=True) * (1.0 / (n_valid - 1))
            y = centered * jax.lax.rsqrt(var + eps)
            y = y * g_ref[...] + bt_ref[...]
        if activation == "relu":
            y = jnp.maximum(y, 0.0)
        elif activation == "lrelu":
            y = jnp.where(y >= 0.0, y, 0.2 * y)
        elif activation == "tanh":
            y = jnp.tanh(y)
        elif activation == "selu":
            alpha = 1.6732632423543772
            scale = 1.0507009873554805
            y = scale * jnp.where(y > 0.0, y, alpha * (jnp.exp(y) - 1.0))
        # activation == "none": identity
        return y

    def kernel(*refs):
        # refs layout: x_ref, w_ref, [b_ref], [g_ref, beta_ref], o_ref
        x_ref, w_ref = refs[0], refs[1]
        idx = 2
        b_ref = g_ref = bt_ref = None
        if has_bias:
            b_ref = refs[idx]
            idx += 1
        if norm == "ln":
            g_ref, bt_ref = refs[idx], refs[idx + 1]
            idx += 2
        o_ref = refs[idx]

        if single_k:
            # One K block: no accumulator needed at all, single store.
            y = jnp.dot(x_ref[...], w_ref[...],
                        preferred_element_type=jnp.float32)
            o_ref[...] = epilogue(y, b_ref, g_ref, bt_ref).astype(o_ref.dtype)
        else:
            k = pl.program_id(2)

            @pl.when(k == 0)
            def _init():
                o_ref[...] = jnp.zeros_like(o_ref)

            # Accumulate directly into the resident f32 output block.
            o_ref[...] += jnp.dot(x_ref[...], w_ref[...],
                                  preferred_element_type=jnp.float32)

            @pl.when(k == pl.num_programs(2) - 1)
            def _finalize():
                o_ref[...] = epilogue(o_ref[...], b_ref, g_ref,
                                      bt_ref).astype(o_ref.dtype)

    return kernel


# ---------------------------------------------------------------------------
# Wrapper: tiling, padding, conditional args, pallas_call
# ---------------------------------------------------------------------------
def linear_block_forward(x, params, *, norm="none", activation="relu",
                         eps=1e-5, matmul_dtype=jnp.bfloat16):
    """Forward of LinearBlock.

    x:      (M, K) float32
    params: dict with
              'w'     : (K, N)   -- fc weight already transposed (= weight.T)
              'b'     : (N,)     -- fc bias (present for norm in {'none','ln'})
              'gamma' : (N,)     -- LayerNorm gamma (norm == 'ln')
              'beta'  : (N,)     -- LayerNorm beta  (norm == 'ln')
    """
    # TODO(synk): norm='bn'/'in' (Batch/InstanceNorm1d) and activation='prelu'
    # (learnable slope) are not implemented in this fused kernel.
    assert norm in ("none", "ln"), f"unsupported norm: {norm}"
    assert activation in ("relu", "lrelu", "tanh", "selu", "none"), activation

    M, K = x.shape
    w = params["w"]
    assert w.shape[0] == K
    N = w.shape[1]
    bias = params.get("b", None)
    has_bias = bias is not None
    gamma = params.get("gamma", None)
    beta = params.get("beta", None)
    if norm == "ln":
        assert gamma is not None and beta is not None

    mm_dtype = jnp.dtype(matmul_dtype) if matmul_dtype is not None else jnp.dtype(x.dtype)
    bytes_mm = mm_dtype.itemsize
    sub = 16 if bytes_mm < 4 else 8          # sublane alignment (bf16 packs 16)
    lane = 128

    vmem_cap = _vmem_capacity_bytes()
    budget = min(vmem_cap * 3 // 8, 40 << 20)   # ~24 MiB on v7x, 40 MiB on v5e/v6e

    # ---- N tiling (lane-dense, multiple of 128) ----
    n128 = _round_up(N, lane)
    if norm == "ln" or n128 <= 512:
        tn = n128                            # LN needs the full row resident
    else:
        best = None
        for cand in (512, 384, 256, 128):    # minimize padding, prefer larger tile
            padded = _round_up(N, cand)
            if best is None or padded < best[0] or (padded == best[0] and cand > best[1]):
                best = (padded, cand)
        tn = best[1]
    Np = _round_up(N, tn)

    # ---- K tiling: full-K when small, else 512/256/128 (prefer divisors of K) ----
    if K <= 1024:
        tk = K
    else:
        tk = 512
        for cand in (512, 256, 128):
            if K % cand == 0:
                tk = cand
                break

    # ---- M tiling ----
    tm = min(_round_up(M, sub), 512)

    def blocks_bytes(tm_, tk_, tn_):
        b = (tm_ * tk_ * bytes_mm) * 2       # x tile, double-buffered
        b += (tk_ * tn_ * bytes_mm) * 2      # w tile, double-buffered
        b += (tm_ * tn_ * 4) * 2             # f32 output/accumulator block
        b += 3 * (tn_ * 4) * 2               # bias / gamma / beta rows
        return b

    # Shrink tiles until the double-buffered working set fits the VMEM budget.
    while blocks_bytes(tm, tk, tn) > budget:
        if K > 1024 and tk > lane:
            tk = max(lane, tk // 2)
        elif tm > sub:
            tm = max(sub, _round_up(tm // 2, sub))
        else:
            break

    Mp = _round_up(M, tm)
    Kp = _round_up(K, tk)

    # ---- prepare (cast / pad) operands ----
    xp = x.astype(mm_dtype)
    wp = w.astype(mm_dtype)
    if Mp != M or Kp != K:
        xp = jnp.pad(xp, ((0, Mp - M), (0, Kp - K)))
    if Kp != K or Np != N:
        wp = jnp.pad(wp, ((0, Kp - K), (0, Np - N)))

    def _row(v):
        v = v.astype(jnp.float32).reshape(1, N)
        if Np != N:
            v = jnp.pad(v, ((0, 0), (0, Np - N)))
        return v

    grid = (Mp // tm, Np // tn, Kp // tk)
    single_k = (Kp == tk)

    in_specs = [
        pl.BlockSpec((tm, tk), lambda i, j, k: (i, k)),   # x tile
        pl.BlockSpec((tk, tn), lambda i, j, k: (k, j)),   # w tile
    ]
    args = [xp, wp]
    if has_bias:
        in_specs.append(pl.BlockSpec((1, tn), lambda i, j, k: (0, j)))
        args.append(_row(bias))
    if norm == "ln":
        in_specs.append(pl.BlockSpec((1, tn), lambda i, j, k: (0, j)))
        in_specs.append(pl.BlockSpec((1, tn), lambda i, j, k: (0, j)))
        args.append(_row(gamma))
        args.append(_row(beta))

    kernel = _make_linear_block_kernel(
        norm=norm, activation=activation, has_bias=has_bias,
        eps=float(eps), n_valid=int(N), n_padded=int(Np), single_k=single_k)

    need = blocks_bytes(tm, tk, tn)
    vmem_limit = int(need * 1.25) + (2 << 20)
    vmem_limit = max(vmem_limit, 32 << 20)
    vmem_limit = min(vmem_limit, max(vmem_cap - (4 << 20), 32 << 20))

    out = pl.pallas_call(
        kernel,
        out_shape=jax.ShapeDtypeStruct((Mp, Np), jnp.float32),
        grid_spec=pltpu.PrefetchScalarGridSpec(
            num_scalar_prefetch=0,
            grid=grid,
            in_specs=in_specs,
            out_specs=pl.BlockSpec((tm, tn), lambda i, j, k: (i, j)),
        ),
        compiler_params=pltpu.CompilerParams(
            # M/N tiles are independent -> shard across TensorCores (v7x);
            # K is the accumulation/reduction axis -> arbitrary (innermost).
            dimension_semantics=("parallel", "parallel", "arbitrary"),
            vmem_limit_bytes=int(vmem_limit),
        ),
    )(*args)

    return out[:M, :N]


# ---------------------------------------------------------------------------
# Demo + correctness check
# ---------------------------------------------------------------------------
def _reference(x, w, b, gamma=None, beta=None, norm="none", activation="relu",
               eps=1e-5):
    y = x @ w + b
    if norm == "ln":
        mean = jnp.mean(y, axis=1, keepdims=True)
        var = jnp.var(y, axis=1, ddof=1, keepdims=True)   # unbiased, like torch .var(1)
        y = (y - mean) / jnp.sqrt(var + eps)
        y = y * gamma + beta
    if activation == "relu":
        y = jnp.maximum(y, 0.0)
    return y


if __name__ == "__main__":
    batch, in_dim, out_dim = 8, 32, 32

    key = jax.random.PRNGKey(0)
    k_x, k_w, k_b, k_g = jax.random.split(key, 4)

    x = jax.random.normal(k_x, (batch, in_dim), jnp.float32)
    w = jax.random.normal(k_w, (in_dim, out_dim), jnp.float32) * 0.1
    b = jax.random.normal(k_b, (out_dim,), jnp.float32) * 0.1
    gamma = jax.random.uniform(k_g, (out_dim,), jnp.float32)
    beta = jnp.zeros((out_dim,), jnp.float32)

    # LinearBlock(in_dim, out_dim, norm='none', activation='relu'), bf16 MXU operands.
    out_none = linear_block_forward(
        x, dict(w=w, b=b), norm="none", activation="relu")
    ref_none = _reference(x, w, b, norm="none", activation="relu")

    # LinearBlock(in_dim, out_dim, norm='ln', activation='relu'), f32 operands.
    out_ln = linear_block_forward(
        x, dict(w=w, b=b, gamma=gamma, beta=beta), norm="ln", activation="relu",
        matmul_dtype=jnp.float32)
    ref_ln = _reference(x, w, b, gamma, beta, norm="ln", activation="relu")

    jax.block_until_ready((out_none, out_ln))
    assert out_none.shape == (batch, out_dim), out_none.shape
    assert out_ln.shape == (batch, out_dim), out_ln.shape
    assert bool(jnp.allclose(out_none, ref_none, atol=5e-2, rtol=5e-2))
    assert bool(jnp.allclose(out_ln, ref_ln, atol=5e-2, rtol=5e-2))
    print("KERNEL_OK")
</pallas_src>

<mosaic_0001>
module attributes {stable_mosaic.version = 11 : i64} {
  func.func @kernel(%arg0: i32, %arg1: i32, %arg2: i32, %arg3: memref<16x32xbf16, #tpu.memory_space<vmem>>, %arg4: memref<32x128xbf16, #tpu.memory_space<vmem>>, %arg5: memref<1x128xf32, #tpu.memory_space<vmem>>, %arg6: memref<16x128xf32, #tpu.memory_space<vmem>>) attributes {dimension_semantics = [#tpu.dimension_semantics<parallel>, #tpu.dimension_semantics<parallel>, #tpu.dimension_semantics<arbitrary>], iteration_bounds = array<i64: 1, 1, 1>, scalar_prefetch = 0 : i64, scratch_operands = 0 : i64, tpu.core_type = #tpu.core_type<tc>, window_params = [{transform_indices = @transform_0, window_bounds = array<i64: 16, 32>}, {transform_indices = @transform_1, window_bounds = array<i64: 32, 128>}, {transform_indices = @transform_2, window_bounds = array<i64: 1, 128>}, {transform_indices = @transform_3, window_bounds = array<i64: 16, 128>}]} {
    %c0 = arith.constant 0 : index
    %c0_0 = arith.constant 0 : index
    %0 = vector.load %arg3[%c0, %c0_0] : memref<16x32xbf16, #tpu.memory_space<vmem>>, vector<16x32xbf16>
    %c0_1 = arith.constant 0 : index
    %c0_2 = arith.constant 0 : index
    %1 = vector.load %arg4[%c0_1, %c0_2] : memref<32x128xbf16, #tpu.memory_space<vmem>>, vector<32x128xbf16>
    %cst = arith.constant dense<0.000000e+00> : vector<16x128xf32>
    %2 = tpu.matmul %0, %1, %cst {dimension_numbers = #tpu.dot_dimension_numbers<[1], [0], [0], [1], [0, 0, 1, 1], [], []>} : vector<16x32xbf16>, vector<32x128xbf16>, vector<16x128xf32> -> vector<16x128xf32>
    %c0_3 = arith.constant 0 : index
    %c0_4 = arith.constant 0 : index
    %3 = vector.load %arg5[%c0_3, %c0_4] : memref<1x128xf32, #tpu.memory_space<vmem>>, vector<1x128xf32>
    %4 = vector.broadcast %3 : vector<1x128xf32> to vector<16x128xf32>
    %5 = arith.addf %2, %4 : vector<16x128xf32>
    %cst_5 = arith.constant 0.000000e+00 : f32
    %6 = vector.broadcast %cst_5 : f32 to vector<16x128xf32>
    %7 = arith.maximumf %5, %6 : vector<16x128xf32>
    %c0_6 = arith.constant 0 : index
    %c0_7 = arith.constant 0 : index
    %8 = vector.load %arg6[%c0_6, %c0_7] : memref<16x128xf32, #tpu.memory_space<vmem>>, vector<16x128xf32>
    tpu.vector_store %arg6[%c0_6, %c0_7], %7 {strides = array<i32>} : memref<16x128xf32, #tpu.memory_space<vmem>>, vector<16x128xf32>,
    return
  }
  func.func @transform_0(%arg0: i32, %arg1: i32, %arg2: i32) -> (i32, i32) {
    %c0_i32 = arith.constant 0 : i32
    return %arg0, %arg2 : i32, i32
  }
  func.func @transform_1(%arg0: i32, %arg1: i32, %arg2: i32) -> (i32, i32) {
    %c0_i32 = arith.constant 0 : i32
    return %arg2, %arg1 : i32, i32
  }
  func.func @transform_2(%arg0: i32, %arg1: i32, %arg2: i32) -> (i32, i32) {
    %c0_i32 = arith.constant 0 : i32
    %c0_i32_0 = arith.constant 0 : i32
    return %c0_i32, %arg1 : i32, i32
  }
  func.func @transform_3(%arg0: i32, %arg1: i32, %arg2: i32) -> (i32, i32) {
    %c0_i32 = arith.constant 0 : i32
    return %arg0, %arg1 : i32, i32
  }
}

</mosaic_0001>

<llo_original>
// kernel: tpu_custom_call.1
$region0: #{tpu_custom_call.1}
  #allocation0 [shape = 'u32[]', space=smem, size = 0x4, offset = 0x4, fixed_abs, tag = 'smem constant byte address 0x4 - core index']
  #allocation1 [shape = 'u32[144,128]{1,0:T(1,128)}', space=vmem, size = 0x12000, scoped, tag = 'internal scratch']
  %s0 = inlined_call_operand.hbm [shape: bf16[16,32], index: 0, kind: input, shape index: {}]
  %s1 = inlined_call_operand.hbm [shape: bf16[32,128], index: 1, kind: input, shape index: {}]
  %s2 = inlined_call_operand.vmem [shape: f32[1,128], index: 2, kind: input, shape index: {}]
  %s3 = inlined_call_operand.hbm [shape: f32[16,128], index: 3, kind: output, shape index: {}]
  %s4 = sld [smem:[#allocation0]]
  $region30: #{tpu_custom_call.1} parent=0
    _
  %s6 = ssub.s32 1, %s4
  %s7 = scalar_select 0, %s6, %s4
  $region1: #{tpu_custom_call.1} parent=0
    #allocation2 [shape = 'u8[4096]{0}', space=vmem, size = 0x1000, scoped, tag = 'input window, operand 0, single buffered']
    #allocation3 [shape = 's32[1]{0}', space=sflag, size = 0x4, scoped, tag = 'scoped memory for tpu_custom_call.1']
    #allocation4 [shape = 's32[1]{0}', space=sflag, size = 0x4, scoped, tag = 'scoped memory for tpu_custom_call.1']
    #allocation5 [shape = 'u8[8192]{0}', space=vmem, size = 0x2000, scoped, tag = 'input window, operand 1, single buffered']
    #allocation6 [shape = 's32[1]{0}', space=sflag, size = 0x4, scoped, tag = 'scoped memory for tpu_custom_call.1']
    #allocation7 [shape = 'u8[8192]{0}', space=vmem, size = 0x2000, scoped, tag = 'output window, operand 0, single buffered']
    %8 = vsyncpa [#allocation3], 0
    %9 = vsyncpa [#allocation6], 0
    %10 = vsyncpa [#allocation4], 0
    // Predicated region
    $region2: #{tpu_custom_call.1} parent=1 // pred_check
      _
    $region3: #{tpu_custom_call.1} parent=1 // pred_check_branch
      %12 = sbr.rel (0) target = $region5
    $region4: #{tpu_custom_call.1} parent=1 // pred_region
      %s14 = ssub.s32 128, 128
      %15 = vsyncadd [#allocation3], %s14
      %s16 = sshll.u32 [#allocation2], 4
      %s17 = int_to_ptr.vmem [resolvable:$true] %s16
      %22 = dma.hbm_to_vmem [thread:$0]  %s0, 128, %s17, [#allocation3], 64, 64, 4
    $region5: #{tpu_custom_call.1} parent=1 // pred_fallthru
      _
    // Predicated region
    $region6: #{tpu_custom_call.1} parent=1 // pred_check
      _
    $region7: #{tpu_custom_call.1} parent=1 // pred_check_branch
      %24 = sbr.rel (0) target = $region9
    $region8: #{tpu_custom_call.1} parent=1 // pred_region
      %s26 = ssub.s32 256, 256
      %27 = vsyncadd [#allocation6], %s26
      %s28 = sshll.u32 [#allocation5], 4
      %s29 = int_to_ptr.vmem [resolvable:$true] %s28
      %34 = dma.hbm_to_vmem [thread:$0]  %s1, 256, %s29, [#allocation6], 64, 64, 4
    $region9: #{tpu_custom_call.1} parent=1 // pred_fallthru
      _
    // Predicated region
    $region10: #{tpu_custom_call.1} parent=1 // pred_check
      _
    $region11: #{tpu_custom_call.1} parent=1 // pred_check_branch
      %36 = sbr.rel (0) target = $region13
    $region12: #{tpu_custom_call.1} parent=1 // pred_region
      _
    $region13: #{tpu_custom_call.1} parent=1 // pred_fallthru
      _
    // Predicated region
    $region14: #{tpu_custom_call.1} parent=1 // pred_check
      _
    $region15: #{tpu_custom_call.1} parent=1 // pred_check_branch
      %38 = sbr.rel (0) target = $region17
    $region16: #{tpu_custom_call.1} parent=1 // pred_region
      %39 = dma.done [#allocation3], 128
    $region17: #{tpu_custom_call.1} parent=1 // pred_fallthru
      _
    // Predicated region
    $region18: #{tpu_custom_call.1} parent=1 // pred_check
      _
    $region19: #{tpu_custom_call.1} parent=1 // pred_check_branch
      %41 = sbr.rel (0) target = $region21
    $region20: #{tpu_custom_call.1} parent=1 // pred_region
      %42 = dma.done [#allocation6], 256
    $region21: #{tpu_custom_call.1} parent=1 // pred_fallthru
      _
    %v44 = vld [vmem:[#allocation2] sm:$0xf]
    %v45 = vld [vmem:[#allocation2 + $0x4] sm:$0xf]
    %v46 = vld [vmem:[#allocation5] sm:$0xf]
    %v47 = vld [vmem:[#allocation5 + $0x4] sm:$0xf]
    %v48 = vld [vmem:[#allocation5 + $0x8] sm:$0xf]
    %v49 = vld [vmem:[#allocation5 + $0xc] sm:$0xf]
    %v50 = vld [vmem:[%s2] sm:$0x1]
    %v52 = vlaneseq
    %v53 = vshrl.u32 %v52, 7
    %v54 = vsub.s32 0, %v53
    %v55 = vrot.slane %v50, %v54
    %v59 = vunpack.c.l.b16 %v44
    %v60 = vunpack.c.l.b16 %v45
    %v61 = vpack.c.b16 %v60, %v59
    %v66 = vunpack.c.l.b16 %v46
    %v67 = vunpack.c.l.b16 %v47
    %v68 = vunpack.c.l.b16 %v48
    %v69 = vunpack.c.l.b16 %v49
    %v70 = vpack.c.b16 %v67, %v66
    %v71 = vpack.c.b16 %v69, %v68
    %vm74 = vcmask 261120
    %v76 = vsel %vm74, %v61, 0
    %78 = vmatprep.subr.bf16.mxu0 0
    %79 = vmatpush1.bf16.msra.mxu0 0
    %80 = vmatprep.subr.bf16.mxu0 0
    %81 = vmatpush1.bf16.msra.mxu0 0
    %82 = vmatprep.subr.bf16.mxu0 0
    %83 = vmatpush1.bf16.msra.mxu0 0
    %84 = vmatprep.subr.bf16.mxu0 0
    %85 = vmatpush1.bf16.msra.mxu0 0
    %86 = vmatprep.subr.bf16.mxu0 0
    %87 = vmatpush1.bf16.msra.mxu0 0
    %88 = vmatprep.subr.bf16.mxu0 0
    %89 = vmatpush1.bf16.msra.mxu0 0
    %90 = vmatprep.subr.bf16.mxu0 0
    %91 = vmatpush1.bf16.msra.mxu0 %v71
    %92 = vmatprep.subr.bf16.mxu0 0
    %93 = vmatpush1.bf16.msra.mxu0 %v70
    %94 = vmatprep.subr.bf16.mxu0 0
    %95 = vmatpush2.bf16.msra.mxu0 0
    %96 = vmatprep.subr.bf16.mxu0 0
    %97 = vmatpush2.bf16.msra.mxu0 0
    %98 = vmatprep.subr.bf16.mxu0 0
    %99 = vmatpush2.bf16.msra.mxu0 0
    %100 = vmatprep.subr.bf16.mxu0 0
    %101 = vmatpush2.bf16.msra.mxu0 0
    %102 = vmatprep.subr.bf16.mxu0 0
    %103 = vmatpush2.bf16.msra.mxu0 0
    %104 = vmatprep.subr.bf16.mxu0 0
    %105 = vmatpush2.bf16.msra.mxu0 0
    %106 = vmatprep.subr.bf16.mxu0 0
    %107 = vmatpush2.bf16.msra.mxu0 0
    %108 = vmatprep.subr.bf16.mxu0 0
    %109 = vmatpush2.bf16.msra.mxu0 0
    %110 = vmatprep.mubr.bf16.mxu0 0
    %111 = vmatmul.mubr.bf16.gmra.mxu0 %v76
    %v112 = vpop.f32.mrf.mxu0
    %v113 = vadd.f32 %v55, %v112
    %v114 = vpop.f32.mrf.mxu0
    %v115 = vpop.f32.mrf.mxu0
    %v116 = vadd.f32 %v55, %v115
    %v117 = vpop.f32.mrf.mxu0
    %118 = vdwg.mxu0
    %v119 = vmax.f32 %v113, 0.0
    %v120 = vmax.f32 %v116, 0.0
    %121 = vst [vmem:[#allocation7] sm:$0xff] %v119
    %122 = vst [vmem:[#allocation7 + $0x8] sm:$0xff] %v120
    // Predicated region
    $region22: #{tpu_custom_call.1} parent=1 // pred_check
      _
    $region23: #{tpu_custom_call.1} parent=1 // pred_check_branch
      %124 = sbr.rel (0) target = $region25
    $region24: #{tpu_custom_call.1} parent=1 // pred_region
      %s126 = ssub.s32 256, 256
      %127 = vsyncadd [#allocation4], %s126
      %s128 = sshll.u32 [#allocation7], 4
      %s129 = int_to_ptr.vmem [resolvable:$true] %s128
      %134 = dma.vmem_to_hbm [thread:$0]  %s129, 256, %s3, [#allocation4], 128, 128, 8
    $region25: #{tpu_custom_call.1} parent=1 // pred_fallthru
      _
    // Predicated region
    $region26: #{tpu_custom_call.1} parent=1 // pred_check
      _
    $region27: #{tpu_custom_call.1} parent=1 // pred_check_branch
      %136 = sbr.rel (0) target = $region29
    $region28: #{tpu_custom_call.1} parent=1 // pred_region
      %137 = dma.done [#allocation4], 256
    $region29: #{tpu_custom_call.1} parent=1 // pred_fallthru
      _
    %138 = vsyncpa [#allocation3], 1
    %139 = vsyncpa [#allocation6], 1
    %140 = vsyncpa [#allocation4], 1

</llo_original>
